<compile_context>
chip_gen: v6e
topology: v6e:2x2x1
jax: 0.10.0
libtpu: 0.0.40
codegen_flags: <defaults>
</compile_context>

<pallas_src>
import functools

import numpy as np
import jax
import jax.numpy as jnp
from jax.experimental import pallas as pl
from jax.experimental.pallas import tpu as pltpu


def _interp_matrix(n_in, n_out):
    """1-D linear interpolation matrix (n_out, n_in), PyTorch align_corners=True."""
    idx = np.arange(n_out)
    if n_out == 1 or n_in == 1:
        m = np.zeros((n_out, n_in), np.float64)
        m[:, 0] = 1.0
        return m
    src = idx * (n_in - 1) / (n_out - 1)
    i0 = np.clip(np.floor(src).astype(np.int64), 0, n_in - 2)
    t = src - i0
    m = np.zeros((n_out, n_in), np.float64)
    m[idx, i0] += 1.0 - t
    m[idx, i0 + 1] += t
    return m


def _tap_shifted(a):
    """Three shifted + zero-padded copies of an interp matrix, one per 3-tap offset.

    out[k, p, :] = a[p + k - 1, :] if 0 <= p + k - 1 < n_out else 0
    (absorbs the conv's 1-pixel zero padding and the tap offset along H).
    """
    n_out = a.shape[0]
    out = np.zeros((3,) + a.shape, a.dtype)
    out[0, 1:, :] = a[:-1, :]          # tap offset -1
    out[1] = a                         # tap offset  0
    out[2, : n_out - 1, :] = a[1:, :]  # tap offset +1
    return out


def _make_kernel(n_pack, w2):
    """Kernel closure over the batch lane-packing factor and per-image out width."""
    lanes = n_pack * w2

    def kernel(x_ref, awt_ref, p_ref, b_ref, o_ref):
        # x_ref  : (1, Cin*H, B*W)         bf16, rows = (ci, h), lanes = (b, w)
        # awt_ref: (B*W, B*W2)             bf16, block-diagonal W-upsample (Aw^T)
        # p_ref  : (Cout*H2/R, 3*Cin*H)    bf16, conv taps folded with H-upsample
        # b_ref  : (Cout*H2/R, B*W2)       f32,  pre-broadcast bias
        # o_ref  : (1, Cout*H2/R, B*W2)    f32,  rows = (co, p), lanes = (b, q)
        x2 = x_ref[0]
        # Single W-direction upsample matmul for all lane-packed images.
        xw = jnp.dot(x2, awt_ref[...], preferred_element_type=jnp.float32)
        # Tap-shifted variants via XLU roll + per-image boundary masks (VPU);
        # this also absorbs the conv's 1-pixel zero padding along W.
        col = jax.lax.broadcasted_iota(jnp.int32, xw.shape, 1)
        first = functools.reduce(
            jnp.logical_or, [col == b * w2 for b in range(n_pack)])
        last = functools.reduce(
            jnp.logical_or, [col == b * w2 + (w2 - 1) for b in range(n_pack)])
        xw_m = jnp.where(first, 0.0, pltpu.roll(xw, shift=1, axis=1))
        xw_p = jnp.where(last, 0.0, pltpu.roll(xw, shift=lanes - 1, axis=1))
        # Stack the three taps along the contraction axis and contract against
        # P_all in one deep (K = 3*Cin*H) MXU matmul; bias added in f32.
        xw_all = jnp.concatenate([xw_m, xw, xw_p], axis=0).astype(jnp.bfloat16)
        acc = jnp.dot(p_ref[...], xw_all, preferred_element_type=jnp.float32)
        o_ref[0] = acc + b_ref[...]

    return kernel


def upconv_pallas(x_nchw, weight_oihw, bias, scale=2):
    N, Cin, H, W = x_nchw.shape
    Cout = weight_oihw.shape[0]
    H2, W2 = H * scale, W * scale

    # Batch lane-packing factor: fill the 128-wide lane axis with B images.
    B = max(1, min(N, 128 // W2)) if W2 <= 128 else 1
    while N % B:
        B -= 1
    G = N // B

    # Output-row split: keeps both v7x TensorCores busy when G collapses to 1.
    R = 2 if (Cout * H2) % 32 == 0 else 1

    # ---- constants -----------------------------------------------------------
    # H-direction: conv kh taps + H-upsample + channel mixing folded into P_all.
    ah_s = _tap_shifted(_interp_matrix(H, H2))              # (3, H2, H)
    p_all = jnp.einsum('oikv,kph->opvih',
                       weight_oihw.astype(jnp.float32),
                       jnp.asarray(ah_s, jnp.float32),
                       precision=jax.lax.Precision.HIGHEST)
    # columns ordered kw * (Cin*H) + ci*H + h, matching [xw_m ; xw ; xw_p]
    p_all = p_all.reshape(Cout * H2, 3 * Cin * H).astype(jnp.bfloat16)

    # W-direction: block-diagonal (one block per packed image) Aw^T, unshifted.
    awt1 = _interp_matrix(W, W2).T                          # (W, W2)
    awt_bd = np.zeros((B * W, B * W2), np.float32)
    for b in range(B):
        awt_bd[b * W:(b + 1) * W, b * W2:(b + 1) * W2] = awt1
    awt_bd = jnp.asarray(awt_bd, jnp.bfloat16)

    # Lane-dense pre-broadcast bias (f32, single VPU add after the MXU).
    b_rows = jnp.broadcast_to(
        jnp.repeat(bias.astype(jnp.float32), H2)[:, None], (Cout * H2, B * W2))

    # ---- pack batch onto the lane axis: (N,Cin,H,W) -> (G, Cin*H, B*W) -------
    x_packed = (x_nchw.reshape(G, B, Cin, H, W)
                .transpose(0, 2, 3, 1, 4)
                .reshape(G, Cin * H, B * W)
                .astype(jnp.bfloat16))

    kernel = _make_kernel(B, W2)
    out_flat = pl.pallas_call(
        kernel,
        out_shape=jax.ShapeDtypeStruct((G, Cout * H2, B * W2), jnp.float32),
        grid=(G, R),
        in_specs=[
            pl.BlockSpec((1, Cin * H, B * W), lambda g, r: (g, 0, 0)),
            pl.BlockSpec((B * W, B * W2), lambda g, r: (0, 0)),
            pl.BlockSpec((Cout * H2 // R, 3 * Cin * H), lambda g, r: (r, 0)),
            pl.BlockSpec((Cout * H2 // R, B * W2), lambda g, r: (r, 0)),
        ],
        out_specs=pl.BlockSpec((1, Cout * H2 // R, B * W2),
                               lambda g, r: (g, r, 0)),
        compiler_params=pltpu.CompilerParams(
            dimension_semantics=("parallel", "parallel")),
    )(x_packed, awt_bd, p_all, b_rows)

    # ---- unpack: (G, Cout*H2, B*W2) -> NCHW (cheap layout plumbing) ----------
    return (out_flat.reshape(G, Cout, H2, B, W2)
            .transpose(0, 3, 1, 2, 4)
            .reshape(N, Cout, H2, W2))


def upconv_reference(x_nchw, weight_oihw, bias, scale=2):
    """Pure-JAX reference (same math as the PyTorch forward), high precision."""
    N, Cin, H, W = x_nchw.shape
    H2, W2 = H * scale, W * scale
    ah = jnp.asarray(_interp_matrix(H, H2), jnp.float32)
    aw = jnp.asarray(_interp_matrix(W, W2), jnp.float32)
    up = jnp.einsum('ph,nchw->ncpw', ah, x_nchw, precision=jax.lax.Precision.HIGHEST)
    up = jnp.einsum('qw,ncpw->ncpq', aw, up, precision=jax.lax.Precision.HIGHEST)
    out = jax.lax.conv_general_dilated(
        up, weight_oihw, window_strides=(1, 1), padding=((1, 1), (1, 1)),
        dimension_numbers=('NCHW', 'OIHW', 'NCHW'),
        precision=jax.lax.Precision.HIGHEST)
    return out + bias[None, :, None, None]


if __name__ == "__main__":
    key = jax.random.PRNGKey(0)
    k_x, k_w, k_b = jax.random.split(key, 3)

    N, inc, outc, H, W = 2, 4, 8, 16, 16
    x = jax.random.normal(k_x, (N, inc, H, W), jnp.float32)
    weight = 0.1 * jax.random.normal(k_w, (outc, inc, 3, 3), jnp.float32)
    bias = 0.1 * jax.random.normal(k_b, (outc,), jnp.float32)

    out = upconv_pallas(x, weight, bias, scale=2)
    out = jax.block_until_ready(out)

    ref = upconv_reference(x, weight, bias, scale=2)
    assert out.shape == (N, outc, 2 * H, 2 * W), out.shape
    # Kernel matmul operands are bf16 (f32 accumulate); tolerance sized for that.
    np.testing.assert_allclose(np.asarray(out), np.asarray(ref),
                               atol=5e-2, rtol=5e-2)
    print("KERNEL_OK")
</pallas_src>

<mosaic_0001>
module attributes {stable_mosaic.version = 11 : i64} {
  func.func @kernel(%arg0: i32, %arg1: i32, %arg2: memref<1x64x32xbf16, #tpu.memory_space<vmem>>, %arg3: memref<32x64xbf16, #tpu.memory_space<vmem>>, %arg4: memref<128x192xbf16, #tpu.memory_space<vmem>>, %arg5: memref<128x64xf32, #tpu.memory_space<vmem>>, %arg6: memref<1x128x64xf32, #tpu.memory_space<vmem>>) attributes {dimension_semantics = [#tpu.dimension_semantics<parallel>, #tpu.dimension_semantics<parallel>], iteration_bounds = array<i64: 1, 2>, scalar_prefetch = 0 : i64, scratch_operands = 0 : i64, tpu.core_type = #tpu.core_type<tc>, window_params = [{transform_indices = @transform_0, window_bounds = array<i64: 1, 64, 32>}, {pipeline_mode = #tpu.pipeline_mode<synchronous>, transform_indices = @transform_1, window_bounds = array<i64: 32, 64>}, {transform_indices = @transform_2, window_bounds = array<i64: 128, 192>}, {transform_indices = @transform_3, window_bounds = array<i64: 128, 64>}, {transform_indices = @transform_4, window_bounds = array<i64: 1, 128, 64>}]} {
    %c0 = arith.constant 0 : index
    %c0_0 = arith.constant 0 : index
    %c0_1 = arith.constant 0 : index
    %0 = vector.load %arg2[%c0, %c0_0, %c0_1] : memref<1x64x32xbf16, #tpu.memory_space<vmem>>, vector<1x64x32xbf16>
    %1 = vector.shape_cast %0 : vector<1x64x32xbf16> to vector<64x32xbf16>
    %c0_2 = arith.constant 0 : index
    %c0_3 = arith.constant 0 : index
    %2 = vector.load %arg3[%c0_2, %c0_3] : memref<32x64xbf16, #tpu.memory_space<vmem>>, vector<32x64xbf16>
    %cst = arith.constant dense<0.000000e+00> : vector<64x64xf32>
    %3 = tpu.matmul %1, %2, %cst {dimension_numbers = #tpu.dot_dimension_numbers<[1], [0], [0], [1], [0, 0, 1, 1], [], []>} : vector<64x32xbf16>, vector<32x64xbf16>, vector<64x64xf32> -> vector<64x64xf32>
    %4 = tpu.iota {dimensions = array<i32: 1>} : vector<64x64xi32>
    %c0_i32 = arith.constant 0 : i32
    %5 = vector.broadcast %c0_i32 : i32 to vector<64x64xi32>
    %6 = arith.cmpi eq, %4, %5 : vector<64x64xi32>
    %c32_i32 = arith.constant 32 : i32
    %7 = vector.broadcast %c32_i32 : i32 to vector<64x64xi32>
    %8 = arith.cmpi eq, %4, %7 : vector<64x64xi32>
    %9 = arith.ori %6, %8 : vector<64x64xi1>
    %c31_i32 = arith.constant 31 : i32
    %10 = vector.broadcast %c31_i32 : i32 to vector<64x64xi32>
    %11 = arith.cmpi eq, %4, %10 : vector<64x64xi32>
    %c63_i32 = arith.constant 63 : i32
    %12 = vector.broadcast %c63_i32 : i32 to vector<64x64xi32>
    %13 = arith.cmpi eq, %4, %12 : vector<64x64xi32>
    %14 = arith.ori %11, %13 : vector<64x64xi1>
    %c1_i32 = arith.constant 1 : i32
    %15 = tpu.dynamic_rotate %3 by %c1_i32 dim 1 : vector<64x64xf32>, i32 -> vector<64x64xf32>
    %cst_4 = arith.constant 0.000000e+00 : f32
    %16 = vector.broadcast %cst_4 : f32 to vector<64x64xf32>
    %17 = arith.select %9, %16, %15 : vector<64x64xi1>, vector<64x64xf32>
    %c63_i32_5 = arith.constant 63 : i32
    %18 = tpu.dynamic_rotate %3 by %c63_i32_5 dim 1 : vector<64x64xf32>, i32 -> vector<64x64xf32>
    %cst_6 = arith.constant 0.000000e+00 : f32
    %19 = vector.broadcast %cst_6 : f32 to vector<64x64xf32>
    %20 = arith.select %14, %19, %18 : vector<64x64xi1>, vector<64x64xf32>
    %21 = tpu.concatenate %17, %3, %20 in 0 : vector<64x64xf32>, vector<64x64xf32>, vector<64x64xf32> -> vector<192x64xf32>
    %22 = arith.truncf %21 : vector<192x64xf32> to vector<192x64xbf16>
    %c0_7 = arith.constant 0 : index
    %c0_8 = arith.constant 0 : index
    %23 = vector.load %arg4[%c0_7, %c0_8] : memref<128x192xbf16, #tpu.memory_space<vmem>>, vector<128x192xbf16>
    %cst_9 = arith.constant dense<0.000000e+00> : vector<128x64xf32>
    %24 = tpu.matmul %23, %22, %cst_9 {dimension_numbers = #tpu.dot_dimension_numbers<[1], [0], [0], [1], [0, 0, 1, 1], [], []>} : vector<128x192xbf16>, vector<192x64xbf16>, vector<128x64xf32> -> vector<128x64xf32>
    %c0_10 = arith.constant 0 : index
    %c0_11 = arith.constant 0 : index
    %25 = vector.load %arg5[%c0_10, %c0_11] : memref<128x64xf32, #tpu.memory_space<vmem>>, vector<128x64xf32>
    %26 = arith.addf %24, %25 : vector<128x64xf32>
    %c0_12 = arith.constant 0 : index
    %c0_13 = arith.constant 0 : index
    %c0_14 = arith.constant 0 : index
    %27 = vector.load %arg6[%c0_12, %c0_13, %c0_14] : memref<1x128x64xf32, #tpu.memory_space<vmem>>, vector<1x128x64xf32>
    %28 = vector.shape_cast %27 : vector<1x128x64xf32> to vector<128x64xf32>
    %29 = vector.shape_cast %26 : vector<128x64xf32> to vector<1x128x64xf32>
    tpu.vector_store %arg6[%c0_12, %c0_13, %c0_14], %29 {strides = array<i32>} : memref<1x128x64xf32, #tpu.memory_space<vmem>>, vector<1x128x64xf32>,
    return
  }
  func.func @transform_0(%arg0: i32, %arg1: i32) -> (i32, i32, i32) {
    %c0_i32 = arith.constant 0 : i32
    %c0_i32_0 = arith.constant 0 : i32
    %c0_i32_1 = arith.constant 0 : i32
    return %arg0, %c0_i32, %c0_i32_0 : i32, i32, i32
  }
  func.func @transform_1(%arg0: i32, %arg1: i32) -> (i32, i32) {
    %c0_i32 = arith.constant 0 : i32
    %c0_i32_0 = arith.constant 0 : i32
    %c0_i32_1 = arith.constant 0 : i32
    return %c0_i32, %c0_i32_0 : i32, i32
  }
  func.func @transform_2(%arg0: i32, %arg1: i32) -> (i32, i32) {
    %c0_i32 = arith.constant 0 : i32
    %c0_i32_0 = arith.constant 0 : i32
    return %arg1, %c0_i32 : i32, i32
  }
  func.func @transform_3(%arg0: i32, %arg1: i32) -> (i32, i32) {
    %c0_i32 = arith.constant 0 : i32
    %c0_i32_0 = arith.constant 0 : i32
    return %arg1, %c0_i32 : i32, i32
  }
  func.func @transform_4(%arg0: i32, %arg1: i32) -> (i32, i32, i32) {
    %c0_i32 = arith.constant 0 : i32
    %c0_i32_0 = arith.constant 0 : i32
    return %arg0, %arg1, %c0_i32 : i32, i32, i32
  }
}

</mosaic_0001>

<llo_original>
// kernel: tpu_custom_call.1
$region0: #{tpu_custom_call.1}
  #allocation0 [shape = 'u32[]', space=smem, size = 0x4, offset = 0x4, fixed_abs, tag = 'smem constant byte address 0x4 - core index']
  #allocation1 [shape = 'u32[144,128]{1,0:T(1,128)}', space=vmem, size = 0x12000, scoped, tag = 'internal scratch']
  %s0 = inlined_call_operand.vmem [shape: bf16[1,64,32], index: 0, kind: input, shape index: {}]
  %s1 = inlined_call_operand.vmem [shape: bf16[32,64], index: 1, kind: input, shape index: {}]
  %s2 = inlined_call_operand.vmem [shape: bf16[256,192], index: 2, kind: input, shape index: {}]
  %s3 = inlined_call_operand.vmem [shape: f32[256,64], index: 3, kind: input, shape index: {}]
  %s4 = inlined_call_operand.vmem [shape: f32[1,256,64], index: 4, kind: output, shape index: {}]
  %s5 = sld [smem:[#allocation0]]
  $region49: #{tpu_custom_call.1} parent=0
    _
  %s7 = ssub.s32 1, %s5
  %s8 = scalar_select 0, %s7, %s5
  loop: start=0, step=1, limit=4
  $region2: #{tpu_custom_call.1} parent=0 // loop_pre_header
    _
  $region3: #{tpu_custom_call.1} parent=0 // loop_header
    %s10 = sphi 0, %s14
    %p11 = scmp.ge.s32.totalorder %s10, 4
    %s17 = sphi 0, %s29
    %s18 = sphi 0, %s25
    %s19 = sphi 0, %s17
    %s20 = sphi 0, %s18
    %s21 = sphi 0, %s19
    %s22 = sphi 0, %s20
    %s32 = sphi 0, %s34
    %s35 = sphi 0, %s32
    %s36 = sphi 0, %s35
    %s52 = sphi 0, %s36
    %s56 = sphi 0, %s56
    %s58 = sphi 0, %s56
    %s59 = sphi 0, %s58
    %s73 = sphi 0, %s59
    %s79 = sphi 0, %s81
    %s82 = sphi 0, %s79
    %s83 = sphi 0, %s82
    %s99 = sphi 0, %s83
    %s105 = sphi 0, %s107
    %s108 = sphi 0, %s105
    %s109 = sphi 0, %s108
    %s125 = sphi 0, %s109
    %s133 = sphi 0, %s135
    %s136 = sphi 0, %s133
    %s137 = sphi 0, %s136
    %s153 = sphi 0, %s137
  $region4: #{tpu_custom_call.1} parent=0 // loop_header_branch
    %13 = sbr.rel (%p11) target = $region8
  $region5: #{tpu_custom_call.1} parent=0 // loop_body
    %s15 = ssub.s32 %s10, 1
    %s16 = ssub.s32 %s10, 2
    %s23 = sadd.s32 1, %s18
    %p24 = scmp.ge.s32.totalorder %s23, 2
    %s25 = scalar_select %p24, 0, %s23
    %s26 = sadd.s32 1, %s17
    %s27 = scalar_select %p24, %s26, %s17
    %p28 = scmp.ge.s32.totalorder %s27, 1
    %s29 = scalar_select %p28, 0, %s27
    %s30 = ssub.s32 %s17, %s29
    %p31 = scmp.eq.s32.totalorder %s30, 0
    %s33 = sadd.s32 %s32, 1
    %s34 = scalar_select %p31, %s32, %s33
    %p37 = pneg %p31
    %p38 = scmp.eq.s32.totalorder %s10, 1
    %p39 = por %p37, %p38
    %p40 = scmp.ne.s32.totalorder %s32, %s35
    %p41 = scmp.eq.s32.totalorder %s10, 0
    %p42 = por %p40, %p41
    %p43 = scmp.ne.s32.totalorder %s32, %s35
    %p44 = scmp.eq.s32.totalorder %s15, 1
    %p45 = por %p43, %p44
    %p46 = scmp.ne.s32.totalorder %s35, %s36
    %p47 = scmp.eq.s32.totalorder %s15, 0
    %p48 = por %p46, %p47
    %p49 = scmp.ne.s32.totalorder %s35, %s36
    %p50 = scmp.eq.s32.totalorder %s16, 1
    %p51 = por %p49, %p50
    %p53 = scmp.ne.s32.totalorder %s36, %s52
    %p54 = scmp.eq.s32.totalorder %s16, 0
    %p55 = por %p53, %p54
    %s57 = sadd.s32 %s56, 1
    %p60 = scmp.eq.s32.totalorder %s10, 1
    %p61 = scmp.ne.s32.totalorder %s56, %s58
    %p62 = scmp.eq.s32.totalorder %s10, 0
    %p63 = por %p61, %p62
    %p64 = scmp.ne.s32.totalorder %s56, %s58
    %p65 = scmp.eq.s32.totalorder %s15, 1
    %p66 = por %p64, %p65
    %p67 = scmp.ne.s32.totalorder %s58, %s59
    %p68 = scmp.eq.s32.totalorder %s15, 0
    %p69 = por %p67, %p68
    %p70 = scmp.ne.s32.totalorder %s58, %s59
    %p71 = scmp.eq.s32.totalorder %s16, 1
    %p72 = por %p70, %p71
    %p74 = scmp.ne.s32.totalorder %s59, %s73
    %p75 = scmp.eq.s32.totalorder %s16, 0
    %p76 = por %p74, %p75
    %s77 = ssub.s32 %s18, %s25
    %p78 = scmp.eq.s32.totalorder %s77, 0
    %s80 = sadd.s32 %s79, 1
    %s81 = scalar_select %p78, %s79, %s80
    %p84 = pneg %p78
    %p85 = scmp.eq.s32.totalorder %s10, 1
    %p86 = por %p84, %p85
    %p87 = scmp.ne.s32.totalorder %s79, %s82
    %p88 = scmp.eq.s32.totalorder %s10, 0
    %p89 = por %p87, %p88
    %p90 = scmp.ne.s32.totalorder %s79, %s82
    %p91 = scmp.eq.s32.totalorder %s15, 1
    %p92 = por %p90, %p91
    %p93 = scmp.ne.s32.totalorder %s82, %s83
    %p94 = scmp.eq.s32.totalorder %s15, 0
    %p95 = por %p93, %p94
    %p96 = scmp.ne.s32.totalorder %s82, %s83
    %p97 = scmp.eq.s32.totalorder %s16, 1
    %p98 = por %p96, %p97
    %p100 = scmp.ne.s32.totalorder %s83, %s99
    %p101 = scmp.eq.s32.totalorder %s16, 0
    %p102 = por %p100, %p101
    %s103 = ssub.s32 %s18, %s25
    %p104 = scmp.eq.s32.totalorder %s103, 0
    %s106 = sadd.s32 %s105, 1
    %s107 = scalar_select %p104, %s105, %s106
    %p110 = pneg %p104
    %p111 = scmp.eq.s32.totalorder %s10, 1
    %p112 = por %p110, %p111
    %p113 = scmp.ne.s32.totalorder %s105, %s108
    %p114 = scmp.eq.s32.totalorder %s10, 0
    %p115 = por %p113, %p114
    %p116 = scmp.ne.s32.totalorder %s105, %s108
    %p117 = scmp.eq.s32.totalorder %s15, 1
    %p118 = por %p116, %p117
    %p119 = scmp.ne.s32.totalorder %s108, %s109
    %p120 = scmp.eq.s32.totalorder %s15, 0
    %p121 = por %p119, %p120
    %p122 = scmp.ne.s32.totalorder %s108, %s109
    %p123 = scmp.eq.s32.totalorder %s16, 1
    %p124 = por %p122, %p123
    %p126 = scmp.ne.s32.totalorder %s109, %s125
    %p127 = scmp.eq.s32.totalorder %s16, 0
    %p128 = por %p126, %p127
    %s129 = ssub.s32 %s17, %s29
    %s130 = ssub.s32 %s18, %s25
    %s131 = sor.u32 %s129, %s130
    %p132 = scmp.eq.s32.totalorder %s131, 0
    %s134 = sadd.s32 %s133, 1
    %s135 = scalar_select %p132, %s133, %s134
    %p138 = pneg %p132
    %p139 = scmp.eq.s32.totalorder %s10, 1
    %p140 = por %p138, %p139
    %p141 = scmp.ne.s32.totalorder %s133, %s136
    %p142 = scmp.eq.s32.totalorder %s10, 0
    %p143 = por %p141, %p142
    %p144 = scmp.ne.s32.totalorder %s133, %s136
    %p145 = scmp.eq.s32.totalorder %s15, 1
    %p146 = por %p144, %p145
    %p147 = scmp.ne.s32.totalorder %s136, %s137
    %p148 = scmp.eq.s32.totalorder %s15, 0
    %p149 = por %p147, %p148
    %p150 = scmp.ne.s32.totalorder %s136, %s137
    %p151 = scmp.eq.s32.totalorder %s16, 1
    %p152 = por %p150, %p151
    %p154 = scmp.ne.s32.totalorder %s137, %s153
    %p155 = scmp.eq.s32.totalorder %s16, 0
    %p156 = por %p154, %p155
    %p157 = scmp.le.s32.totalorder 1, %s10
    %p158 = scmp.lt.s32.totalorder %s10, 3
    %p159 = pnand %p157, %p158
    %p160 = pneg %p159
    // Predicated region
    $region9: #{tpu_custom_call.1} parent=5 // pred_check
      _
    $region10: #{tpu_custom_call.1} parent=5 // pred_check_branch
      %162 = sbr.rel (%p159) target = $region12
    $region11: #{tpu_custom_call.1} parent=5 // pred_region
      %s163 = ssub.s32 %s10, 1
      // Predicated region
      $region13: #{tpu_custom_call.1} parent=11 // pred_check
        %p164 = pneg %p48
      $region14: #{tpu_custom_call.1} parent=11 // pred_check_branch
        %166 = sbr.rel (%p164) target = $region16
      $region15: #{tpu_custom_call.1} parent=11 // pred_region
        %p167 = scmp.lt.s32.totalorder %s19, 0
        %s168 = scalar_select %p167, %s19, 0
        %s169 = smul.addr %s168, 8
        %s170 = smul.addr %s169, 4
        %s171 = scalar_lea.vmem %s0, %s170
      $region16: #{tpu_custom_call.1} parent=11 // pred_fallthru
        _
      // Predicated region
      $region17: #{tpu_custom_call.1} parent=11 // pred_check
        %p172 = pneg %p69
      $region18: #{tpu_custom_call.1} parent=11 // pred_check_branch
        %174 = sbr.rel (%p172) target = $region20
      $region19: #{tpu_custom_call.1} parent=11 // pred_region
        _
      $region20: #{tpu_custom_call.1} parent=11 // pred_fallthru
        _
    $region12: #{tpu_custom_call.1} parent=5 // pred_fallthru
      _
    %p175 = scmp.lt.s32.totalorder %s10, 2
    // Predicated region
    $region21: #{tpu_custom_call.1} parent=5 // pred_check
      %p176 = pneg %p175
    $region22: #{tpu_custom_call.1} parent=5 // pred_check_branch
      %178 = sbr.rel (%p176) target = $region24
    $region23: #{tpu_custom_call.1} parent=5 // pred_region
      // Predicated region
      $region25: #{tpu_custom_call.1} parent=23 // pred_check
        %p179 = pneg %p89
      $region26: #{tpu_custom_call.1} parent=23 // pred_check_branch
        %181 = sbr.rel (%p179) target = $region28
      $region27: #{tpu_custom_call.1} parent=23 // pred_region
        %s182 = smul.u32 16, %s18
        %p183 = scmp.lt.s32.totalorder %s182, 31
        %s184 = scalar_select %p183, %s182, 31
        %s185 = smul.addr %s184, 2
        %s186 = smul.addr %s185, 4
        %s187 = scalar_lea.vmem %s2, %s186
        %s188 = smul.u32 16, %s18
      $region28: #{tpu_custom_call.1} parent=23 // pred_fallthru
        _
      // Predicated region
      $region29: #{tpu_custom_call.1} parent=23 // pred_check
        %p189 = pneg %p115
      $region30: #{tpu_custom_call.1} parent=23 // pred_check_branch
        %191 = sbr.rel (%p189) target = $region32
      $region31: #{tpu_custom_call.1} parent=23 // pred_region
        %s192 = smul.u32 16, %s18
        %p193 = scmp.lt.s32.totalorder %s192, 31
        %s194 = scalar_select %p193, %s192, 31
        %s195 = smul.addr %s194, 8
        %s196 = scalar_lea.vmem %s3, %s195
        %s197 = smul.u32 16, %s18
      $region32: #{tpu_custom_call.1} parent=23 // pred_fallthru
        _
    $region24: #{tpu_custom_call.1} parent=5 // pred_fallthru
      _
    %p198 = scmp.le.s32.totalorder 1, %s10
    %p199 = scmp.lt.s32.totalorder %s10, 3
    %p200 = pnand %p198, %p199
    %p201 = pneg %p200
    // Predicated region
    $region33: #{tpu_custom_call.1} parent=5 // pred_check
      _
    $region34: #{tpu_custom_call.1} parent=5 // pred_check_branch
      %203 = sbr.rel (%p200) target = $region36
    $region35: #{tpu_custom_call.1} parent=5 // pred_region
      %s204 = ssub.s32 %s10, 1
      %p205 = scmp.lt.s32.totalorder %s19, 0
      %s206 = scalar_select %p205, %s19, 0
      %s207 = smul.addr %s206, 8
      %s208 = smul.addr %s207, 4
      %s209 = scalar_lea.vmem %s0, %s208
      %p210 = pneg %p48
      %p211 = pneg %p45
      %p212 = pneg %p69
      %p213 = pneg %p66
      %s214 = smul.u32 16, %s20
      %p215 = scmp.lt.s32.totalorder %s214, 31
      %s216 = scalar_select %p215, %s214, 31
      %s217 = smul.addr %s216, 2
      %s218 = smul.addr %s217, 4
      %s219 = scalar_lea.vmem %s2, %s218
      %p220 = pneg %p95
      %p221 = pneg %p92
      %s222 = smul.u32 16, %s20
      %p223 = scmp.lt.s32.totalorder %s222, 31
      %s224 = scalar_select %p223, %s222, 31
      %s225 = smul.addr %s224, 8
      %s226 = scalar_lea.vmem %s3, %s225
      %p227 = pneg %p121
      %p228 = pneg %p118
      %p229 = pneg %p149
      %p230 = pneg %p146
      %s231 = smul.u32 16, %s20
      %p232 = scmp.lt.s32.totalorder %s19, 0
      %s233 = scalar_select %p232, %s19, 0
      %p234 = scmp.lt.s32.totalorder %s231, 31
      %s235 = scalar_select %p234, %s231, 31
      %s236 = smul.addr %s233, 32
      %s237 = sadd.s32 %s235, %s236
      %s238 = smul.addr %s237, 8
      %s239 = scalar_lea.vmem %s4, %s238
      %p240 = scmp.lt.s32.totalorder %s19, 0
      %s241 = scalar_select %p240, %s19, 0
      %s242 = smul.addr %s241, 8
      %s243 = smul.addr %s242, 4
      %s244 = scalar_lea.vmem %s0, %s243
      %s245 = smul.u32 16, %s20
      %p246 = scmp.lt.s32.totalorder %s245, 31
      %s247 = scalar_select %p246, %s245, 31
      %s248 = smul.addr %s247, 2
      %s249 = smul.addr %s248, 4
      %s250 = scalar_lea.vmem %s2, %s249
      %s251 = smul.u32 16, %s20
      %s252 = smul.u32 16, %s20
      %p253 = scmp.lt.s32.totalorder %s252, 31
      %s254 = scalar_select %p253, %s252, 31
      %s255 = smul.addr %s254, 8
      %s256 = scalar_lea.vmem %s3, %s255
      %s257 = smul.u32 16, %s20
      %s258 = smul.u32 16, %s20
      %p259 = scmp.lt.s32.totalorder %s19, 0
      %s260 = scalar_select %p259, %s19, 0
      %p261 = scmp.lt.s32.totalorder %s258, 31
      %s262 = scalar_select %p261, %s258, 31
      %s263 = smul.addr %s260, 32
      %s264 = sadd.s32 %s262, %s263
      %s265 = smul.addr %s264, 8
      %s266 = scalar_lea.vmem %s4, %s265
      %s267 = smul.u32 16, %s20
      %v269 = vld [vmem:[%s244] sm:$0xf]
      %v270 = vld [vmem:[%s244 + $0x4] sm:$0xf]
      %v271 = vld [vmem:[%s244 + $0x8] sm:$0xf]
      %v272 = vld [vmem:[%s244 + $0xc] sm:$0xf]
      %v273 = vld [vmem:[%s244 + $0x10] sm:$0xf]
      %v274 = vld [vmem:[%s244 + $0x14] sm:$0xf]
      %v275 = vld [vmem:[%s244 + $0x18] sm:$0xf]
      %v276 = vld [vmem:[%s244 + $0x1c] sm:$0xf]
      %v277 = vld [vmem:[%s1] sm:$0xf]
      %v278 = vld [vmem:[%s1 + $0x4] sm:$0xf]
      %v279 = vld [vmem:[%s1 + $0x8] sm:$0xf]
      %v280 = vld [vmem:[%s1 + $0xc] sm:$0xf]
      %v289 = vunpack.c.l.b16 %v269
      %v290 = vunpack.c.l.b16 %v270
      %v291 = vunpack.c.l.b16 %v271
      %v292 = vunpack.c.l.b16 %v272
      %v293 = vunpack.c.l.b16 %v273
      %v294 = vunpack.c.l.b16 %v274
      %v295 = vunpack.c.l.b16 %v275
      %v296 = vunpack.c.l.b16 %v276
      %v297 = vpack.c.b16 %v290, %v289
      %v298 = vpack.c.b16 %v292, %v291
      %v299 = vpack.c.b16 %v294, %v293
      %v300 = vpack.c.b16 %v296, %v295
      %v305 = vunpack.c.l.b16 %v277
      %v306 = vunpack.c.l.b16 %v278
      %v307 = vunpack.c.l.b16 %v279
      %v308 = vunpack.c.l.b16 %v280
      %v309 = vpack.c.b16 %v306, %v305
      %v310 = vpack.c.b16 %v308, %v307
      %vm313 = vcmask 261120
      %v315 = vsel %vm313, %v297, 0
      %v318 = vsel %vm313, %v298, 0
      %v321 = vsel %vm313, %v299, 0
      %v324 = vsel %vm313, %v300, 0
      %326 = vmatprep.subr.bf16.mxu0 0
      %327 = vmatpush1.bf16.msra.mxu0 0
      %328 = vmatprep.subr.bf16.mxu0 0
      %329 = vmatpush1.bf16.msra.mxu0 0
      %330 = vmatprep.subr.bf16.mxu0 0
      %331 = vmatpush1.bf16.msra.mxu0 0
      %332 = vmatprep.subr.bf16.mxu0 0
      %333 = vmatpush1.bf16.msra.mxu0 0
      %334 = vmatprep.subr.bf16.mxu0 0
      %335 = vmatpush1.bf16.msra.mxu0 0
      %336 = vmatprep.subr.bf16.mxu0 0
      %337 = vmatpush1.bf16.msra.mxu0 0
      %338 = vmatprep.subr.bf16.mxu0 0
      %339 = vmatpush1.bf16.msra.mxu0 %v310
      %340 = vmatprep.subr.bf16.mxu0 0
      %341 = vmatpush1.bf16.msra.mxu0 %v309
      %342 = vmatprep.subr.bf16.mxu0 0
      %343 = vmatpush2.bf16.msra.mxu0 0
      %344 = vmatprep.subr.bf16.mxu0 0
      %345 = vmatpush2.bf16.msra.mxu0 0
      %346 = vmatprep.subr.bf16.mxu0 0
      %347 = vmatpush2.bf16.msra.mxu0 0
      %348 = vmatprep.subr.bf16.mxu0 0
      %349 = vmatpush2.bf16.msra.mxu0 0
      %350 = vmatprep.subr.bf16.mxu0 0
      %351 = vmatpush2.bf16.msra.mxu0 0
      %352 = vmatprep.subr.bf16.mxu0 0
      %353 = vmatpush2.bf16.msra.mxu0 0
      %354 = vmatprep.subr.bf16.mxu0 0
      %355 = vmatpush2.bf16.msra.mxu0 0
      %356 = vmatprep.subr.bf16.mxu0 0
      %357 = vmatpush2.bf16.msra.mxu0 0
      %358 = vmatprep.mubr.bf16.mxu0 0
      %359 = vmatmul.mubr.bf16.gmra.mxu0 %v315
      %v360 = vpop.f32.mrf.mxu0
      %v361 = vadd.f32 0.0, %v360
      %v362 = vpop.f32.mrf.mxu0
      %v363 = vpop.f32.mrf.mxu0
      %v364 = vadd.f32 0.0, %v363
      %v365 = vpop.f32.mrf.mxu0
      %366 = vmatprep.mubr.bf16.mxu0 0
      %367 = vmatmul.mubr.bf16.gmra.mxu0 %v318
      %v368 = vpop.f32.mrf.mxu0
      %v369 = vadd.f32 0.0, %v368
      %v370 = vpop.f32.mrf.mxu0
      %v371 = vpop.f32.mrf.mxu0
      %v372 = vadd.f32 0.0, %v371
      %v373 = vpop.f32.mrf.mxu0
      %374 = vmatprep.mubr.bf16.mxu0 0
      %375 = vmatmul.mubr.bf16.gmra.mxu0 %v321
      %v376 = vpop.f32.mrf.mxu0
      %v377 = vadd.f32 0.0, %v376
      %v378 = vpop.f32.mrf.mxu0
      %v379 = vpop.f32.mrf.mxu0
      %v380 = vadd.f32 0.0, %v379
      %v381 = vpop.f32.mrf.mxu0
      %382 = vmatprep.mubr.bf16.mxu0 0
      %383 = vmatmul.mubr.bf16.gmra.mxu0 %v324
      %v384 = vpop.f32.mrf.mxu0
      %v385 = vadd.f32 0.0, %v384
      %v386 = vpop.f32.mrf.mxu0
      %v387 = vpop.f32.mrf.mxu0
      %v388 = vadd.f32 0.0, %v387
      %v389 = vpop.f32.mrf.mxu0
      %390 = vdwg.mxu0
      %v391 = vlaneseq
      %v392 = vand.u32 %v391, 127
      %vm393 = vcmp.eq.s32.totalorder %v392, 0
      %vm394 = vcmp.eq.s32.totalorder %v392, 32
      %vm395 = vmor %vm393, %vm394
      %vm396 = vcmp.eq.s32.totalorder %v392, 31
      %vm397 = vcmp.eq.s32.totalorder %v392, 63
      %vm398 = vmor %vm396, %vm397
      %vm399 = vcmask 1048064
      %400 = vrot.lane.b32.xlu0 %v361, 64
      %v401 = vpop.permute.xlu0 %400
      %v402 = vsel %vm399, %v401, %v361
      %403 = vrot.lane.b32.xlu0 %v364, 64
      %v404 = vpop.permute.xlu0 %403
      %v405 = vsel %vm399, %v404, %v364
      %406 = vrot.lane.b32.xlu0 %v369, 64
      %v407 = vpop.permute.xlu0 %406
      %v408 = vsel %vm399, %v407, %v369
      %409 = vrot.lane.b32.xlu0 %v372, 64
      %v410 = vpop.permute.xlu0 %409
      %v411 = vsel %vm399, %v410, %v372
      %412 = vrot.lane.b32.xlu0 %v377, 64
      %v413 = vpop.permute.xlu0 %412
      %v414 = vsel %vm399, %v413, %v377
      %415 = vrot.lane.b32.xlu0 %v380, 64
      %v416 = vpop.permute.xlu0 %415
      %v417 = vsel %vm399, %v416, %v380
      %418 = vrot.lane.b32.xlu0 %v385, 64
      %v419 = vpop.permute.xlu0 %418
      %v420 = vsel %vm399, %v419, %v385
      %421 = vrot.lane.b32.xlu0 %v388, 64
      %v422 = vpop.permute.xlu0 %421
      %v423 = vsel %vm399, %v422, %v388
      %424 = vrot.lane.b32.xlu0 %v402, 64
      %v425 = vpop.permute.xlu0 %424
      %426 = vrot.lane.b32.xlu0 %v405, 64
      %v427 = vpop.permute.xlu0 %426
      %428 = vrot.lane.b32.xlu0 %v408, 64
      %v429 = vpop.permute.xlu0 %428
      %430 = vrot.lane.b32.xlu0 %v411, 64
      %v431 = vpop.permute.xlu0 %430
      %432 = vrot.lane.b32.xlu0 %v414, 64
      %v433 = vpop.permute.xlu0 %432
      %434 = vrot.lane.b32.xlu0 %v417, 64
      %v435 = vpop.permute.xlu0 %434
      %436 = vrot.lane.b32.xlu0 %v420, 64
      %v437 = vpop.permute.xlu0 %436
      %438 = vrot.lane.b32.xlu0 %v423, 64
      %v439 = vpop.permute.xlu0 %438
      %v440 = vsel %vm399, %v425, %v361
      %v441 = vsel %vm399, %v427, %v364
      %v442 = vsel %vm399, %v429, %v369
      %v443 = vsel %vm399, %v431, %v372
      %v444 = vsel %vm399, %v433, %v377
      %v445 = vsel %vm399, %v435, %v380
      %v446 = vsel %vm399, %v437, %v385
      %v447 = vsel %vm399, %v439, %v388
      %456 = vrot.lane.b32.xlu0 %v440, 65
      %v457 = vpop.permute.xlu0 %456
      %458 = vrot.lane.b32.xlu0 %v441, 65
      %v459 = vpop.permute.xlu0 %458
      %460 = vrot.lane.b32.xlu0 %v442, 65
      %v461 = vpop.permute.xlu0 %460
      %462 = vrot.lane.b32.xlu0 %v443, 65
      %v463 = vpop.permute.xlu0 %462
      %464 = vrot.lane.b32.xlu0 %v444, 65
      %v465 = vpop.permute.xlu0 %464
      %466 = vrot.lane.b32.xlu0 %v445, 65
      %v467 = vpop.permute.xlu0 %466
      %468 = vrot.lane.b32.xlu0 %v446, 65
      %v469 = vpop.permute.xlu0 %468
      %470 = vrot.lane.b32.xlu0 %v447, 65
      %v471 = vpop.permute.xlu0 %470
      %v480 = vsel %vm395, 0.0, %v457
      %v481 = vsel %vm395, 0.0, %v459
      %v482 = vsel %vm395, 0.0, %v461
      %v483 = vsel %vm395, 0.0, %v463
      %v484 = vsel %vm395, 0.0, %v465
      %v485 = vsel %vm395, 0.0, %v467
      %v486 = vsel %vm395, 0.0, %v469
      %v487 = vsel %vm395, 0.0, %v471
      %488 = vrot.lane.b32.xlu0 %v440, 127
      %v489 = vpop.permute.xlu0 %488
      %490 = vrot.lane.b32.xlu0 %v441, 127
      %v491 = vpop.permute.xlu0 %490
      %492 = vrot.lane.b32.xlu0 %v442, 127
      %v493 = vpop.permute.xlu0 %492
      %494 = vrot.lane.b32.xlu0 %v443, 127
      %v495 = vpop.permute.xlu0 %494
      %496 = vrot.lane.b32.xlu0 %v444, 127
      %v497 = vpop.permute.xlu0 %496
      %498 = vrot.lane.b32.xlu0 %v445, 127
      %v499 = vpop.permute.xlu0 %498
      %500 = vrot.lane.b32.xlu0 %v446, 127
      %v501 = vpop.permute.xlu0 %500
      %502 = vrot.lane.b32.xlu0 %v447, 127
      %v503 = vpop.permute.xlu0 %502
      %v512 = vsel %vm398, 0.0, %v489
      %v513 = vsel %vm398, 0.0, %v491
      %v514 = vsel %vm398, 0.0, %v493
      %v515 = vsel %vm398, 0.0, %v495
      %v516 = vsel %vm398, 0.0, %v497
      %v517 = vsel %vm398, 0.0, %v499
      %v518 = vsel %vm398, 0.0, %v501
      %v519 = vsel %vm398, 0.0, %v503
      %v520 = vpack.c.bf16 %v481, %v480
      %v521 = vpack.c.bf16 %v483, %v482
      %v522 = vpack.c.bf16 %v485, %v484
      %v523 = vpack.c.bf16 %v487, %v486
      %v524 = vpack.c.bf16 %v364, %v361
      %v525 = vpack.c.bf16 %v372, %v369
      %v526 = vpack.c.bf16 %v380, %v377
      %v527 = vpack.c.bf16 %v388, %v385
      %v528 = vpack.c.bf16 %v513, %v512
      %v529 = vpack.c.bf16 %v515, %v514
      %v530 = vpack.c.bf16 %v517, %v516
      %v531 = vpack.c.bf16 %v519, %v518
      %v532 = vld [vmem:[%s250] sm:$0xff]
      %v533 = vld [vmem:[%s250 + $0x8] sm:$0xff]
      %v534 = vld [vmem:[%s250 + $0x10] sm:$0xff]
      %v535 = vld [vmem:[%s250 + $0x18] sm:$0xff]
      %v536 = vld [vmem:[%s250 + $0x20] sm:$0xff]
      %v537 = vld [vmem:[%s250 + $0x28] sm:$0xff]
      %v538 = vld [vmem:[%s250 + $0x30] sm:$0xff]
      %v539 = vld [vmem:[%s250 + $0x38] sm:$0xff]
      %v540 = vld [vmem:[%s250 + $0x40] sm:$0xff]
      %v541 = vld [vmem:[%s250 + $0x48] sm:$0xff]
      %v542 = vld [vmem:[%s250 + $0x50] sm:$0xff]
      %v543 = vld [vmem:[%s250 + $0x58] sm:$0xff]
      %v544 = vld [vmem:[%s250 + $0x60] sm:$0xff]
      %v545 = vld [vmem:[%s250 + $0x68] sm:$0xff]
      %v546 = vld [vmem:[%s250 + $0x70] sm:$0xff]
      %v547 = vld [vmem:[%s250 + $0x78] sm:$0xff]
      %v548 = vld [vmem:[%s256] sm:$0xff]
      %v549 = vld [vmem:[%s256 + $0x8] sm:$0xff]
      %v550 = vld [vmem:[%s256 + $0x10] sm:$0xff]
      %v551 = vld [vmem:[%s256 + $0x18] sm:$0xff]
      %v552 = vld [vmem:[%s256 + $0x20] sm:$0xff]
      %v553 = vld [vmem:[%s256 + $0x28] sm:$0xff]
      %v554 = vld [vmem:[%s256 + $0x30] sm:$0xff]
      %v555 = vld [vmem:[%s256 + $0x38] sm:$0xff]
      %v556 = vld [vmem:[%s256 + $0x40] sm:$0xff]
      %v557 = vld [vmem:[%s256 + $0x48] sm:$0xff]
      %v558 = vld [vmem:[%s256 + $0x50] sm:$0xff]
      %v559 = vld [vmem:[%s256 + $0x58] sm:$0xff]
      %v560 = vld [vmem:[%s256 + $0x60] sm:$0xff]
      %v561 = vld [vmem:[%s256 + $0x68] sm:$0xff]
      %v562 = vld [vmem:[%s256 + $0x70] sm:$0xff]
      %v563 = vld [vmem:[%s256 + $0x78] sm:$0xff]
      %v580 = vunpack.c.l.b16 %v532
      %v581 = vunpack.c.h.b16 %v532
      %v582 = vunpack.c.l.b16 %v533
      %v583 = vunpack.c.h.b16 %v533
      %v584 = vunpack.c.l.b16 %v534
      %v585 = vunpack.c.h.b16 %v534
      %v586 = vunpack.c.l.b16 %v535
      %v587 = vunpack.c.h.b16 %v535
      %v588 = vunpack.c.l.b16 %v536
      %v589 = vunpack.c.h.b16 %v536
      %v590 = vunpack.c.l.b16 %v537
      %v591 = vunpack.c.h.b16 %v537
      %v592 = vunpack.c.l.b16 %v538
      %v593 = vunpack.c.h.b16 %v538
      %v594 = vunpack.c.l.b16 %v539
      %v595 = vunpack.c.h.b16 %v539
      %v596 = vunpack.c.l.b16 %v540
      %v597 = vunpack.c.h.b16 %v540
      %v598 = vunpack.c.l.b16 %v541
      %v599 = vunpack.c.h.b16 %v541
      %v600 = vunpack.c.l.b16 %v542
      %v601 = vunpack.c.h.b16 %v542
      %v602 = vunpack.c.l.b16 %v543
      %v603 = vunpack.c.h.b16 %v543
      %v604 = vunpack.c.l.b16 %v544
      %v605 = vunpack.c.h.b16 %v544
      %v606 = vunpack.c.l.b16 %v545
      %v607 = vunpack.c.h.b16 %v545
      %v608 = vunpack.c.l.b16 %v546
      %v609 = vunpack.c.h.b16 %v546
      %v610 = vunpack.c.l.b16 %v547
      %v611 = vunpack.c.h.b16 %v547
      %v612 = vpack.c.b16 %v582, %v580
      %v613 = vpack.c.b16 %v583, %v581
      %v614 = vpack.c.b16 %v586, %v584
      %v615 = vpack.c.b16 %v587, %v585
      %v616 = vpack.c.b16 %v590, %v588
      %v617 = vpack.c.b16 %v591, %v589
      %v618 = vpack.c.b16 %v594, %v592
      %v619 = vpack.c.b16 %v595, %v593
      %v620 = vpack.c.b16 %v598, %v596
      %v621 = vpack.c.b16 %v599, %v597
      %v622 = vpack.c.b16 %v602, %v600
      %v623 = vpack.c.b16 %v603, %v601
      %v624 = vpack.c.b16 %v606, %v604
      %v625 = vpack.c.b16 %v607, %v605
      %v626 = vpack.c.b16 %v610, %v608
      %v627 = vpack.c.b16 %v611, %v609
      %vm636 = vcmask 523264
      %v638 = vsel %vm636, %v613, 0
      %v641 = vsel %vm636, %v615, 0
      %v644 = vsel %vm636, %v617, 0
      %v647 = vsel %vm636, %v619, 0
      %v650 = vsel %vm636, %v621, 0
      %v653 = vsel %vm636, %v623, 0
      %v656 = vsel %vm636, %v625, 0
      %v659 = vsel %vm636, %v627, 0
      %661 = vmatprep.subr.bf16.mxu0 0
      %662 = vmatpush1.bf16.msra.mxu0 %v527
      %663 = vmatprep.subr.bf16.mxu0 0
      %664 = vmatpush1.bf16.msra.mxu0 %v526
      %665 = vmatprep.subr.bf16.mxu0 0
      %666 = vmatpush1.bf16.msra.mxu0 %v525
      %667 = vmatprep.subr.bf16.mxu0 0
      %668 = vmatpush1.bf16.msra.mxu0 %v524
      %669 = vmatprep.subr.bf16.mxu0 0
      %670 = vmatpush1.bf16.msra.mxu0 %v523
      %671 = vmatprep.subr.bf16.mxu0 0
      %672 = vmatpush1.bf16.msra.mxu0 %v522
      %673 = vmatprep.subr.bf16.mxu0 0
      %674 = vmatpush1.bf16.msra.mxu0 %v521
      %675 = vmatprep.subr.bf16.mxu0 0
      %676 = vmatpush1.bf16.msra.mxu0 %v520
      %677 = vmatprep.subr.bf16.mxu0 0
      %678 = vmatpush2.bf16.msra.mxu0 0
      %679 = vmatprep.subr.bf16.mxu0 0
      %680 = vmatpush2.bf16.msra.mxu0 0
      %681 = vmatprep.subr.bf16.mxu0 0
      %682 = vmatpush2.bf16.msra.mxu0 0
      %683 = vmatprep.subr.bf16.mxu0 0
      %684 = vmatpush2.bf16.msra.mxu0 0
      %685 = vmatprep.subr.bf16.mxu0 0
      %686 = vmatpush2.bf16.msra.mxu0 %v531
      %687 = vmatprep.subr.bf16.mxu0 0
      %688 = vmatpush2.bf16.msra.mxu0 %v530
      %689 = vmatprep.subr.bf16.mxu0 0
      %690 = vmatpush2.bf16.msra.mxu0 %v529
      %691 = vmatprep.subr.bf16.mxu0 0
      %692 = vmatpush2.bf16.msra.mxu0 %v528
      %693 = vmatprep.mubr.bf16.mxu0 %v638
      %694 = vmatmul.mubr.bf16.gmra.mxu0 %v612
      %v695 = vpop.f32.mrf.mxu0
      %v696 = vadd.f32 %v548, %v695
      %v697 = vpop.f32.mrf.mxu0
      %v698 = vpop.f32.mrf.mxu0
      %v699 = vadd.f32 %v549, %v698
      %v700 = vpop.f32.mrf.mxu0
      %701 = vmatprep.mubr.bf16.mxu0 %v641
      %702 = vmatmul.mubr.bf16.gmra.mxu0 %v614
      %v703 = vpop.f32.mrf.mxu0
      %v704 = vadd.f32 %v550, %v703
      %v705 = vpop.f32.mrf.mxu0
      %v706 = vpop.f32.mrf.mxu0
      %v707 = vadd.f32 %v551, %v706
      %v708 = vpop.f32.mrf.mxu0
      %709 = vmatprep.mubr.bf16.mxu0 %v644
      %710 = vmatmul.mubr.bf16.gmra.mxu0 %v616
      %v711 = vpop.f32.mrf.mxu0
      %v712 = vadd.f32 %v552, %v711
      %v713 = vpop.f32.mrf.mxu0
      %v714 = vpop.f32.mrf.mxu0
      %v715 = vadd.f32 %v553, %v714
      %v716 = vpop.f32.mrf.mxu0
      %717 = vmatprep.mubr.bf16.mxu0 %v647
      %718 = vmatmul.mubr.bf16.gmra.mxu0 %v618
      %v719 = vpop.f32.mrf.mxu0
      %v720 = vadd.f32 %v554, %v719
      %v721 = vpop.f32.mrf.mxu0
      %v722 = vpop.f32.mrf.mxu0
      %v723 = vadd.f32 %v555, %v722
      %v724 = vpop.f32.mrf.mxu0
      %725 = vmatprep.mubr.bf16.mxu0 %v650
      %726 = vmatmul.mubr.bf16.gmra.mxu0 %v620
      %v727 = vpop.f32.mrf.mxu0
      %v728 = vadd.f32 %v556, %v727
      %v729 = vpop.f32.mrf.mxu0
      %v730 = vpop.f32.mrf.mxu0
      %v731 = vadd.f32 %v557, %v730
      %v732 = vpop.f32.mrf.mxu0
      %733 = vmatprep.mubr.bf16.mxu0 %v653
      %734 = vmatmul.mubr.bf16.gmra.mxu0 %v622
      %v735 = vpop.f32.mrf.mxu0
      %v736 = vadd.f32 %v558, %v735
      %v737 = vpop.f32.mrf.mxu0
      %v738 = vpop.f32.mrf.mxu0
      %v739 = vadd.f32 %v559, %v738
      %v740 = vpop.f32.mrf.mxu0
      %741 = vmatprep.mubr.bf16.mxu0 %v656
      %742 = vmatmul.mubr.bf16.gmra.mxu0 %v624
      %v743 = vpop.f32.mrf.mxu0
      %v744 = vadd.f32 %v560, %v743
      %v745 = vpop.f32.mrf.mxu0
      %v746 = vpop.f32.mrf.mxu0
      %v747 = vadd.f32 %v561, %v746
      %v748 = vpop.f32.mrf.mxu0
      %749 = vmatprep.mubr.bf16.mxu0 %v659
      %750 = vmatmul.mubr.bf16.gmra.mxu0 %v626
      %v751 = vpop.f32.mrf.mxu0
      %v752 = vadd.f32 %v562, %v751
      %v753 = vpop.f32.mrf.mxu0
      %v754 = vpop.f32.mrf.mxu0
      %v755 = vadd.f32 %v563, %v754
      %v756 = vpop.f32.mrf.mxu0
      %757 = vdwg.mxu0
      %758 = vst.msk [vmem:[%s266] sm:$0xff] %vm636, %v696
      %759 = vst.msk [vmem:[%s266 + $0x8] sm:$0xff] %vm636, %v699
      %760 = vst.msk [vmem:[%s266 + $0x10] sm:$0xff] %vm636, %v704
      %761 = vst.msk [vmem:[%s266 + $0x18] sm:$0xff] %vm636, %v707
      %762 = vst.msk [vmem:[%s266 + $0x20] sm:$0xff] %vm636, %v712
      %763 = vst.msk [vmem:[%s266 + $0x28] sm:$0xff] %vm636, %v715
      %764 = vst.msk [vmem:[%s266 + $0x30] sm:$0xff] %vm636, %v720
      %765 = vst.msk [vmem:[%s266 + $0x38] sm:$0xff] %vm636, %v723
      %766 = vst.msk [vmem:[%s266 + $0x40] sm:$0xff] %vm636, %v728
      %767 = vst.msk [vmem:[%s266 + $0x48] sm:$0xff] %vm636, %v731
      %768 = vst.msk [vmem:[%s266 + $0x50] sm:$0xff] %vm636, %v736
      %769 = vst.msk [vmem:[%s266 + $0x58] sm:$0xff] %vm636, %v739
      %770 = vst.msk [vmem:[%s266 + $0x60] sm:$0xff] %vm636, %v744
      %771 = vst.msk [vmem:[%s266 + $0x68] sm:$0xff] %vm636, %v747
      %772 = vst.msk [vmem:[%s266 + $0x70] sm:$0xff] %vm636, %v752
      %773 = vst.msk [vmem:[%s266 + $0x78] sm:$0xff] %vm636, %v755
      %s774 = smul.u32 16, %s20
      %p775 = scmp.lt.s32.totalorder %s19, 0
      %s776 = scalar_select %p775, %s19, 0
      %p777 = scmp.lt.s32.totalorder %s774, 31
      %s778 = scalar_select %p777, %s774, 31
      %s779 = smul.addr %s776, 32
      %s780 = sadd.s32 %s778, %s779
      %s781 = smul.addr %s780, 8
      %s782 = scalar_lea.vmem %s4, %s781
      // Predicated region
      $region37: #{tpu_custom_call.1} parent=35 // pred_check
        %p783 = pneg %p146
      $region38: #{tpu_custom_call.1} parent=35 // pred_check_branch
        %785 = sbr.rel (%p783) target = $region40
      $region39: #{tpu_custom_call.1} parent=35 // pred_region
        %s786 = smul.u32 16, %s20
      $region40: #{tpu_custom_call.1} parent=35 // pred_fallthru
        _
    $region36: #{tpu_custom_call.1} parent=5 // pred_fallthru
      _
    %p787 = scmp.le.s32.totalorder 2, %s10
    // Predicated region
    $region41: #{tpu_custom_call.1} parent=5 // pred_check
      %p788 = pneg %p787
    $region42: #{tpu_custom_call.1} parent=5 // pred_check_branch
      %790 = sbr.rel (%p788) target = $region44
    $region43: #{tpu_custom_call.1} parent=5 // pred_region
      %s791 = ssub.s32 %s10, 2
      // Predicated region
      $region45: #{tpu_custom_call.1} parent=43 // pred_check
        %p792 = pneg %p152
      $region46: #{tpu_custom_call.1} parent=43 // pred_check_branch
        %794 = sbr.rel (%p792) target = $region48
      $region47: #{tpu_custom_call.1} parent=43 // pred_region
        %s795 = smul.u32 16, %s22
        %p796 = scmp.lt.s32.totalorder %s21, 0
        %s797 = scalar_select %p796, %s21, 0
        %p798 = scmp.lt.s32.totalorder %s795, 31
        %s799 = scalar_select %p798, %s795, 31
        %s800 = smul.addr %s797, 32
        %s801 = sadd.s32 %s799, %s800
        %s802 = smul.addr %s801, 8
        %s803 = scalar_lea.vmem %s4, %s802
      $region48: #{tpu_custom_call.1} parent=43 // pred_fallthru
        _
    $region44: #{tpu_custom_call.1} parent=5 // pred_fallthru
      _
  $region6: #{tpu_custom_call.1} parent=0 // loop_footer
    %s14 = sadd.s32 1, %s10
  $region7: #{tpu_custom_call.1} parent=0 // loop_footer_branch
    %9 = sbr.rel target = $region3
  $region8: #{tpu_custom_call.1} parent=0 // loop_exit
    _

</llo_original>
